<compile_context>
chip_gen: v7x
topology: tpu7x:2x2x1
jax: 0.10.0
libtpu: 0.0.40
codegen_flags: <defaults>
</compile_context>

<pallas_src>
import functools

import jax
import jax.numpy as jnp
from jax.experimental import pallas as pl
from jax.experimental.pallas import tpu as pltpu

SMALL_NUMBER = 1e-08
_LANES = 128


def _round_up(x, m):
    return ((x + m - 1) // m) * m


def _pick_tile(dim, preferred, multiple):
    """Largest tile <= preferred that is a multiple of `multiple` and divides dim."""
    preferred = max(preferred, multiple)
    if dim <= preferred:
        return dim
    t = (preferred // multiple) * multiple
    while t >= multiple:
        if dim % t == 0:
            return t
        t -= multiple
    # Wrapper-side padding guarantees an aligned divisor exists for the call sites
    # below; this fallback only triggers for unpadded awkward dims.
    return dim


def transform_kernel(ns_ref, w_ref, b_ref, p_ref):
    """One tile of P: ns_tile @ W_big + b_big, fused over all edge types.

    ns_ref : (TS, D)            node-state tile (source rows)
    w_ref  : (D, E*(D+1))       fused augmented transform (per-type last col zero)
    b_ref  : (1, E*(D+1))       fused augmented bias (per-type last element 1.0)
    p_ref  : (TS, E*(D+1))      output tile (bf16)
    """
    p = jnp.dot(ns_ref[...], w_ref[...], preferred_element_type=jnp.float32)
    p = p + b_ref[...]
    p_ref[...] = p.astype(p_ref.dtype)


def aggregate_kernel(adj_ref, p_ref, out_ref, acc_ref, *, hidden_size, tk,
                     p_resident, msg_mean_aggregation):
    """msgs[target tile] = sum_k adj_tile(TM,TK) @ P_chunk(TK,D+1); mean-normalize.

    adj_ref : (TM, TK) int8            tile of adj_cat (targets x fused type/source)
    p_ref   : (E*N, D+1) or (TK, D+1)  bf16 P_cat (resident) or per-k block
    out_ref : (TM, D)                  aggregated messages
    acc_ref : (TM, D+1) f32            persistent accumulator across the k axis
    """
    k = pl.program_id(1)

    @pl.when(k == 0)
    def _():
        acc_ref[...] = jnp.zeros_like(acc_ref)

    # int8 HBM storage -> bf16 MXU operand (widen in-kernel; counts are exact).
    adj = adj_ref[...].astype(jnp.bfloat16)
    if p_resident:
        off = pl.multiple_of(k * tk, tk)
        p = p_ref[pl.ds(off, tk), :]
    else:
        p = p_ref[...]
    acc_ref[...] += jnp.dot(adj, p, preferred_element_type=jnp.float32)

    @pl.when(k == pl.num_programs(1) - 1)
    def _():
        acc = acc_ref[...]
        msgs = acc[:, :hidden_size]
        if msg_mean_aggregation:
            bincount = acc[:, hidden_size:hidden_size + 1]   # exact integer counts
            divisor = jnp.where(bincount == 0.0, 1.0, bincount)
            msgs = msgs / divisor + SMALL_NUMBER              # exact divide (epilogue)
        out_ref[...] = msgs.astype(out_ref.dtype)


def ggnn_message_layer(node_states, weight, bias, adj_cat, *,
                       msg_mean_aggregation=True,
                       tm_target=1024, tk_source=4096, ts_transform=1024):
    """GGNN message layer forward.

    node_states : (N, D)      f32 node states
    weight      : (E, D, D)   per-edge-type transform (in x out), i.e.
                              weight[i] == torch_W[i*D:(i+1)*D, :].T
    bias        : (E, 1, D)   per-edge-type bias row
    adj_cat     : (N, E*N)    dense edge-count matrix in the fused layout:
                              adj_cat[t, i*N + s] = #edges s -> t of edge type i
                              (counts must be <= 127: stored as int8)
    returns     : (N, D)      aggregated incoming messages per node
    """
    n, d = node_states.shape
    e = adj_cat.shape[1] // n
    assert adj_cat.shape == (n, e * n)

    # --- wrapper-side padding (layout glue): guarantees aligned tile divisors. ---
    base = 128 if n > 128 else 8
    n_pad = _round_up(n, base)
    if n_pad != n:
        node_states_p = jnp.pad(node_states, ((0, n_pad - n), (0, 0)))
        adj3 = adj_cat.reshape(n, e, n)
        adj3 = jnp.pad(adj3, ((0, n_pad - n), (0, 0), (0, n_pad - n)))
        adj_cat_p = adj3.reshape(n_pad, e * n_pad)
    else:
        node_states_p, adj_cat_p = node_states, adj_cat

    # Edge counts stored as int8 in HBM (exact for per-(type,src,tgt) multiplicity
    # <= 127); widened to bf16 inside the kernel right before the dot.
    adj_i8 = adj_cat_p.astype(jnp.int8)

    # Fold the bincount "ones" column into augmented parameters and fuse all edge
    # types into a single (D, E*(D+1)) transform.
    w_aug = jnp.concatenate([weight, jnp.zeros((e, d, 1), weight.dtype)], axis=2)
    b_aug = jnp.concatenate([bias, jnp.ones((e, 1, 1), bias.dtype)], axis=2)
    w_big = jnp.transpose(w_aug, (1, 0, 2)).reshape(d, e * (d + 1))
    b_big = b_aug.reshape(1, e * (d + 1))

    # ---- kernel 1: propagated states, computed exactly once, all types fused. ----
    ts = _pick_tile(n_pad, ts_transform, 16 if n_pad % 16 == 0 else 8)
    p = pl.pallas_call(
        transform_kernel,
        out_shape=jax.ShapeDtypeStruct((n_pad, e * (d + 1)), jnp.bfloat16),
        grid_spec=pltpu.PrefetchScalarGridSpec(
            num_scalar_prefetch=0,
            grid=(n_pad // ts,),
            in_specs=[
                pl.BlockSpec((ts, d), lambda s: (s, 0)),                # node_states
                pl.BlockSpec((d, e * (d + 1)), lambda s: (0, 0)),       # W_big
                pl.BlockSpec((1, e * (d + 1)), lambda s: (0, 0)),       # b_big
            ],
            out_specs=pl.BlockSpec((ts, e * (d + 1)), lambda s: (s, 0)),
        ),
        compiler_params=pltpu.CompilerParams(dimension_semantics=("parallel",)),
    )(node_states_p, w_big, b_big)

    # Layout glue (KB scale): (N, E*(D+1)) -> (E*N, D+1) so the aggregation is one
    # long fused contraction over edge type x source.
    p_cat = p.reshape(n_pad, e, d + 1).transpose(1, 0, 2).reshape(e * n_pad, d + 1)

    # ---- kernel 2: tiled, pipelined int8 adjacency stream + f32 accumulation. ----
    tm = _pick_tile(n_pad, tm_target, 32 if n_pad % 32 == 0 else 8)
    tk = _pick_tile(e * n_pad, tk_source, 128)

    p_rows = e * n_pad
    # Keep P fully VMEM-resident when it fits (128-lane padding, x2 buffer slack).
    p_resident = 2 * p_rows * _LANES * 2 <= 8 * 1024 * 1024
    if p_resident:
        p_spec = pl.BlockSpec((p_rows, d + 1), lambda m, k: (0, 0))
        p_vmem = 2 * p_rows * _LANES * 2
    else:
        p_spec = pl.BlockSpec((tk, d + 1), lambda m, k: (k, 0))
        p_vmem = 2 * tk * _LANES * 2

    # Explicit VMEM budget: headroom under v7x's 64 MiB (128 MiB on v5e/v6e).
    need = (2 * tm * tk            # int8 adj tiles, double buffered
            + p_vmem               # P_cat (bf16)
            + tm * _LANES * 4      # f32 accumulator scratch
            + 2 * tm * _LANES * 4) # f32 output tiles
    vmem_limit = int(min(max(2 * need, 16 * 1024 * 1024), 48 * 1024 * 1024))

    kernel = functools.partial(aggregate_kernel, hidden_size=d, tk=tk,
                               p_resident=p_resident,
                               msg_mean_aggregation=msg_mean_aggregation)
    out = pl.pallas_call(
        kernel,
        out_shape=jax.ShapeDtypeStruct((n_pad, d), node_states.dtype),
        grid_spec=pltpu.PrefetchScalarGridSpec(
            num_scalar_prefetch=0,
            grid=(n_pad // tm, (e * n_pad) // tk),
            in_specs=[
                pl.BlockSpec((tm, tk), lambda m, k: (m, k)),   # int8 adj tiles
                p_spec,                                        # P_cat (resident/blocked)
            ],
            out_specs=pl.BlockSpec((tm, d), lambda m, k: (m, 0)),
            scratch_shapes=[pltpu.VMEM((tm, d + 1), jnp.float32)],
        ),
        compiler_params=pltpu.CompilerParams(
            dimension_semantics=("parallel", "arbitrary"),
            vmem_limit_bytes=vmem_limit),
    )(adj_i8, p_cat)

    return out[:n] if n_pad != n else out


def reference_forward(edge_lists, node_states, torch_weight, torch_bias,
                      msg_mean_aggregation=True):
    """Pure-JAX replica of the PyTorch forward (gather + index_add_ + bincount)."""
    n, d = node_states.shape
    e = len(edge_lists)
    prop = node_states @ torch_weight.T + torch_bias        # (N, E*D)
    chunks = jnp.split(prop, e, axis=1)
    msgs = jnp.zeros_like(node_states)
    binc = jnp.zeros((n,), jnp.float32)
    for i, el in enumerate(edge_lists):
        src, tgt = el[:, 0], el[:, 1]
        msgs = msgs.at[tgt].add(chunks[i][src])
        binc = binc.at[tgt].add(1.0)
    if msg_mean_aggregation:
        div = jnp.where(binc == 0.0, 1.0, binc)
        msgs = msgs / div[:, None] + SMALL_NUMBER
    return msgs


def _run_case(key, n, d, e, m, tm, tk, ts):
    k_w, k_ns, k_src, k_tgt = jax.random.split(key, 4)

    # Deterministic Xavier-uniform weight (torch layout: out x in), zero bias.
    bound = (6.0 / (d + e * d)) ** 0.5
    torch_weight = jax.random.uniform(k_w, (e * d, d), jnp.float32,
                                      minval=-bound, maxval=bound)
    torch_bias = jnp.zeros((e * d,), jnp.float32)
    weight = jnp.transpose(torch_weight.reshape(e, d, d), (0, 2, 1))   # (E, D, D)
    bias = torch_bias.reshape(e, 1, d)                                 # (E, 1, D)

    node_states = jax.random.normal(k_ns, (n, d), jnp.float32)
    srcs = jax.random.randint(k_src, (e, m), 0, n)
    tgts = jax.random.randint(k_tgt, (e, m), 0, n)
    edge_lists = [jnp.stack([srcs[i], tgts[i]], axis=1) for i in range(e)]

    # Glue: dense edge-count adjacency directly in the fused (N, E*N) layout.
    adj_cat = jnp.zeros((n, e * n), jnp.float32)
    for i, el in enumerate(edge_lists):
        adj_cat = adj_cat.at[el[:, 1], i * n + el[:, 0]].add(1.0)

    out = ggnn_message_layer(node_states, weight, bias, adj_cat,
                             msg_mean_aggregation=True,
                             tm_target=tm, tk_source=tk, ts_transform=ts)
    out = jax.block_until_ready(out)

    ref = reference_forward(edge_lists, node_states, torch_weight, torch_bias,
                            msg_mean_aggregation=True)
    assert out.shape == (n, d) and out.dtype == jnp.float32
    err = float(jnp.max(jnp.abs(out - ref)))
    # bf16 P_cat is the dominant error term (~0.4% relative); adj is exact int8.
    assert jnp.allclose(out, ref, rtol=2e-2, atol=2e-2), \
        f"mismatch vs reference (N={n}): max |err| = {err}"


if __name__ == "__main__":
    root = jax.random.PRNGKey(0)
    k_small, k_big, k_pad = jax.random.split(root, 3)

    # Toy config matching the module (hidden_size D=32, E=2 with backward edges).
    _run_case(k_small, n=16, d=32, e=2, m=24, tm=1024, tk=4096, ts=1024)
    # Larger case exercising the tiled grid / pl.when accumulator / resident-P path.
    _run_case(k_big, n=512, d=32, e=2, m=2048, tm=128, tk=256, ts=128)
    # Awkward size exercising the wrapper-side padding path (N=100 -> 104).
    _run_case(k_pad, n=100, d=32, e=2, m=300, tm=1024, tk=4096, ts=1024)

    print("KERNEL_OK")
</pallas_src>

<mosaic_0001>
module attributes {stable_mosaic.version = 11 : i64} {
  func.func @transform_kernel(%arg0: i32, %arg1: memref<16x32xf32, #tpu.memory_space<vmem>>, %arg2: memref<32x66xf32, #tpu.memory_space<vmem>>, %arg3: memref<1x66xf32, #tpu.memory_space<vmem>>, %arg4: memref<16x66xbf16, #tpu.memory_space<vmem>>) attributes {dimension_semantics = [#tpu.dimension_semantics<parallel>], iteration_bounds = array<i64: 1>, scalar_prefetch = 0 : i64, scratch_operands = 0 : i64, tpu.core_type = #tpu.core_type<tc>, window_params = [{transform_indices = @transform_0, window_bounds = array<i64: 16, 32>}, {pipeline_mode = #tpu.pipeline_mode<synchronous>, transform_indices = @transform_1, window_bounds = array<i64: 32, 66>}, {pipeline_mode = #tpu.pipeline_mode<synchronous>, transform_indices = @transform_2, window_bounds = array<i64: 1, 66>}, {transform_indices = @transform_3, window_bounds = array<i64: 16, 66>}]} {
    %c0 = arith.constant 0 : index
    %c0_0 = arith.constant 0 : index
    %0 = vector.load %arg1[%c0, %c0_0] : memref<16x32xf32, #tpu.memory_space<vmem>>, vector<16x32xf32>
    %c0_1 = arith.constant 0 : index
    %c0_2 = arith.constant 0 : index
    %1 = vector.load %arg2[%c0_1, %c0_2] : memref<32x66xf32, #tpu.memory_space<vmem>>, vector<32x66xf32>
    %cst = arith.constant dense<0.000000e+00> : vector<16x66xf32>
    %2 = tpu.matmul %0, %1, %cst {dimension_numbers = #tpu.dot_dimension_numbers<[1], [0], [0], [1], [0, 0, 1, 1], [], []>} : vector<16x32xf32>, vector<32x66xf32>, vector<16x66xf32> -> vector<16x66xf32>
    %c0_3 = arith.constant 0 : index
    %c0_4 = arith.constant 0 : index
    %3 = vector.load %arg3[%c0_3, %c0_4] : memref<1x66xf32, #tpu.memory_space<vmem>>, vector<1x66xf32>
    %4 = vector.broadcast %3 : vector<1x66xf32> to vector<16x66xf32>
    %5 = arith.addf %2, %4 : vector<16x66xf32>
    %6 = arith.truncf %5 : vector<16x66xf32> to vector<16x66xbf16>
    %c0_5 = arith.constant 0 : index
    %c0_6 = arith.constant 0 : index
    %7 = vector.load %arg4[%c0_5, %c0_6] : memref<16x66xbf16, #tpu.memory_space<vmem>>, vector<16x66xbf16>
    tpu.vector_store %arg4[%c0_5, %c0_6], %6 {strides = array<i32>} : memref<16x66xbf16, #tpu.memory_space<vmem>>, vector<16x66xbf16>,
    return
  }
  func.func @transform_0(%arg0: i32) -> (i32, i32) {
    %c0_i32 = arith.constant 0 : i32
    %c0_i32_0 = arith.constant 0 : i32
    return %arg0, %c0_i32 : i32, i32
  }
  func.func @transform_1(%arg0: i32) -> (i32, i32) {
    %c0_i32 = arith.constant 0 : i32
    %c0_i32_0 = arith.constant 0 : i32
    %c0_i32_1 = arith.constant 0 : i32
    return %c0_i32, %c0_i32_0 : i32, i32
  }
  func.func @transform_2(%arg0: i32) -> (i32, i32) {
    %c0_i32 = arith.constant 0 : i32
    %c0_i32_0 = arith.constant 0 : i32
    %c0_i32_1 = arith.constant 0 : i32
    return %c0_i32, %c0_i32_0 : i32, i32
  }
  func.func @transform_3(%arg0: i32) -> (i32, i32) {
    %c0_i32 = arith.constant 0 : i32
    %c0_i32_0 = arith.constant 0 : i32
    return %arg0, %c0_i32 : i32, i32
  }
}

</mosaic_0001>

<llo_original>
// kernel: tpu_custom_call.1
$region0: #{tpu_custom_call.1}
  #allocation0 [shape = 'u32[]', space=smem, size = 0x4, offset = 0x4, fixed_abs, tag = 'smem constant byte address 0x4 - core index']
  #allocation1 [shape = 'u32[144,128]{1,0:T(1,128)}', space=vmem, size = 0x12000, scoped, tag = 'internal scratch']
  %s0 = inlined_call_operand.hbm [shape: f32[16,32], index: 0, kind: input, shape index: {}]
  %s1 = inlined_call_operand.hbm [shape: f32[32,66], index: 1, kind: input, shape index: {}]
  %s2 = inlined_call_operand.vmem [shape: f32[1,66], index: 2, kind: input, shape index: {}]
  %s3 = inlined_call_operand.hbm [shape: bf16[16,66], index: 3, kind: output, shape index: {}]
  %s4 = sld [smem:[#allocation0]]
  $region30: #{tpu_custom_call.1} parent=0
    _
  %s6 = ssub.s32 1, %s4
  %s7 = scalar_select 0, %s6, %s4
  $region1: #{tpu_custom_call.1} parent=0
    #allocation2 [shape = 'u8[8192]{0}', space=vmem, size = 0x2000, scoped, tag = 'input window, operand 0, single buffered']
    #allocation3 [shape = 's32[1]{0}', space=sflag, size = 0x4, scoped, tag = 'scoped memory for tpu_custom_call.1']
    #allocation4 [shape = 's32[1]{0}', space=sflag, size = 0x4, scoped, tag = 'scoped memory for tpu_custom_call.1']
    #allocation5 [shape = 'u8[16384]{0}', space=vmem, size = 0x4000, scoped, tag = 'input window, operand 1, single buffered']
    #allocation6 [shape = 's32[1]{0}', space=sflag, size = 0x4, scoped, tag = 'scoped memory for tpu_custom_call.1']
    #allocation7 [shape = 'u8[4096]{0}', space=vmem, size = 0x1000, scoped, tag = 'output window, operand 0, single buffered']
    %8 = vsyncpa [#allocation3], 0
    %9 = vsyncpa [#allocation6], 0
    %10 = vsyncpa [#allocation4], 0
    // Predicated region
    $region2: #{tpu_custom_call.1} parent=1 // pred_check
      _
    $region3: #{tpu_custom_call.1} parent=1 // pred_check_branch
      %12 = sbr.rel (0) target = $region5
    $region4: #{tpu_custom_call.1} parent=1 // pred_region
      %s14 = ssub.s32 256, 256
      %15 = vsyncadd [#allocation3], %s14
      %s16 = sshll.u32 [#allocation2], 4
      %s17 = int_to_ptr.vmem [resolvable:$true] %s16
      %22 = dma.hbm_to_vmem [thread:$0]  %s0, 256, %s17, [#allocation3], 128, 128, 8
    $region5: #{tpu_custom_call.1} parent=1 // pred_fallthru
      _
    // Predicated region
    $region6: #{tpu_custom_call.1} parent=1 // pred_check
      _
    $region7: #{tpu_custom_call.1} parent=1 // pred_check_branch
      %24 = sbr.rel (0) target = $region9
    $region8: #{tpu_custom_call.1} parent=1 // pred_region
      %s26 = ssub.s32 512, 512
      %27 = vsyncadd [#allocation6], %s26
      %s28 = sshll.u32 [#allocation5], 4
      %s29 = int_to_ptr.vmem [resolvable:$true] %s28
      %34 = dma.hbm_to_vmem [thread:$0]  %s1, 512, %s29, [#allocation6], 128, 128, 8
    $region9: #{tpu_custom_call.1} parent=1 // pred_fallthru
      _
    // Predicated region
    $region10: #{tpu_custom_call.1} parent=1 // pred_check
      _
    $region11: #{tpu_custom_call.1} parent=1 // pred_check_branch
      %36 = sbr.rel (0) target = $region13
    $region12: #{tpu_custom_call.1} parent=1 // pred_region
      _
    $region13: #{tpu_custom_call.1} parent=1 // pred_fallthru
      _
    // Predicated region
    $region14: #{tpu_custom_call.1} parent=1 // pred_check
      _
    $region15: #{tpu_custom_call.1} parent=1 // pred_check_branch
      %38 = sbr.rel (0) target = $region17
    $region16: #{tpu_custom_call.1} parent=1 // pred_region
      %39 = dma.done [#allocation3], 256
    $region17: #{tpu_custom_call.1} parent=1 // pred_fallthru
      _
    // Predicated region
    $region18: #{tpu_custom_call.1} parent=1 // pred_check
      _
    $region19: #{tpu_custom_call.1} parent=1 // pred_check_branch
      %41 = sbr.rel (0) target = $region21
    $region20: #{tpu_custom_call.1} parent=1 // pred_region
      %42 = dma.done [#allocation6], 512
    $region21: #{tpu_custom_call.1} parent=1 // pred_fallthru
      _
    %v43 = vld [vmem:[#allocation2] sm:$0xff]
    %v44 = vld [vmem:[#allocation2 + $0x8] sm:$0xff]
    %v45 = vld [vmem:[#allocation5] sm:$0xff]
    %v46 = vld [vmem:[#allocation5 + $0x8] sm:$0xff]
    %v47 = vld [vmem:[#allocation5 + $0x10] sm:$0xff]
    %v48 = vld [vmem:[#allocation5 + $0x18] sm:$0xff]
    %v49 = vld [vmem:[%s2] sm:$0x1]
    %v51 = vlaneseq
    %v52 = vshrl.u32 %v51, 7
    %v53 = vsub.s32 0, %v52
    %v54 = vrot.slane %v49, %v53
    %vm56 = vcmask 261120
    %v58 = vsel %vm56, %v43, 0
    %v61 = vsel %vm56, %v44, 0
    %63 = vmatprep.subr.mxu0 0.0
    %64 = vmatpush1.msra.mxu0 %v45
    %65 = vmatprep.subr.mxu0 0.0
    %66 = vmatpush1.msra.mxu0 %v46
    %67 = vmatprep.subr.mxu0 0.0
    %68 = vmatpush1.msra.mxu0 %v47
    %69 = vmatprep.subr.mxu0 0.0
    %70 = vmatpush1.msra.mxu0 %v48
    %71 = vmatprep.subr.mxu0 0.0
    %72 = vmatpush1.msra.mxu0 0.0
    %73 = vmatprep.subr.mxu0 0.0
    %74 = vmatpush1.msra.mxu0 0.0
    %75 = vmatprep.subr.mxu0 0.0
    %76 = vmatpush1.msra.mxu0 0.0
    %77 = vmatprep.subr.mxu0 0.0
    %78 = vmatpush1.msra.mxu0 0.0
    %79 = vmatprep.subr.mxu0 0.0
    %80 = vmatpush1.msra.mxu0 0.0
    %81 = vmatprep.subr.mxu0 0.0
    %82 = vmatpush1.msra.mxu0 0.0
    %83 = vmatprep.subr.mxu0 0.0
    %84 = vmatpush1.msra.mxu0 0.0
    %85 = vmatprep.subr.mxu0 0.0
    %86 = vmatpush1.msra.mxu0 0.0
    %87 = vmatprep.subr.mxu0 0.0
    %88 = vmatpush1.msra.mxu0 0.0
    %89 = vmatprep.subr.mxu0 0.0
    %90 = vmatpush1.msra.mxu0 0.0
    %91 = vmatprep.subr.mxu0 0.0
    %92 = vmatpush1.msra.mxu0 0.0
    %93 = vmatprep.subr.mxu0 0.0
    %94 = vmatpush1.msra.mxu0 0.0
    %95 = vmatprep.subr.mxu0 0.0
    %96 = vmatpush1.msra.mxu0 0.0
    %97 = vmatprep.subr.mxu0 0.0
    %98 = vmatpush1.msra.mxu0 0.0
    %99 = vmatprep.subr.mxu0 0.0
    %100 = vmatpush1.msra.mxu0 0.0
    %101 = vmatprep.subr.mxu0 0.0
    %102 = vmatpush1.msra.mxu0 0.0
    %103 = vmatprep.subr.mxu0 0.0
    %104 = vmatpush1.msra.mxu0 0.0
    %105 = vmatprep.subr.mxu0 0.0
    %106 = vmatpush1.msra.mxu0 0.0
    %107 = vmatprep.subr.mxu0 0.0
    %108 = vmatpush1.msra.mxu0 0.0
    %109 = vmatprep.subr.mxu0 0.0
    %110 = vmatpush1.msra.mxu0 0.0
    %111 = vmatprep.subr.mxu0 0.0
    %112 = vmatpush1.msra.mxu0 0.0
    %113 = vmatprep.subr.mxu0 0.0
    %114 = vmatpush1.msra.mxu0 0.0
    %115 = vmatprep.subr.mxu0 0.0
    %116 = vmatpush1.msra.mxu0 0.0
    %117 = vmatprep.subr.mxu0 0.0
    %118 = vmatpush1.msra.mxu0 0.0
    %119 = vmatprep.subr.mxu0 0.0
    %120 = vmatpush1.msra.mxu0 0.0
    %121 = vmatprep.subr.mxu0 0.0
    %122 = vmatpush1.msra.mxu0 0.0
    %123 = vmatprep.subr.mxu0 0.0
    %124 = vmatpush1.msra.mxu0 0.0
    %125 = vmatprep.subr.mxu0 0.0
    %126 = vmatpush1.msra.mxu0 0.0
    %127 = vmatprep.mubr.f32.mxu0 0.0
    %128 = vmatmul.mubr.f32.gmra.mrb[0].mxu0 %v58
    %v129 = vpop.f32.mrb[0].mxu0
    %v130 = vadd.f32 %v54, %v129
    %v131 = vpop.f32.mrb[0].mxu0
    %132 = vmatprep.mubr.f32.mxu0 0.0
    %133 = vmatmul.mubr.f32.gmra.mrb[0].mxu0 %v61
    %v134 = vpop.f32.mrb[0].mxu0
    %v135 = vadd.f32 %v54, %v134
    %v136 = vpop.f32.mrb[0].mxu0
    %137 = vdwg.mxu0
    %v138 = vpack.c.bf16 %v135, %v130
    %v140 = vunpack.c.l.b16 %v138
    %v141 = vunpack.c.h.b16 %v138
    %v142 = vpack.c.b16 %v140, %v140
    %v143 = vpack.c.b16 %v141, %v141
    %vm146 = vcmask 535552
    %147 = vst.msk [vmem:[#allocation7] sm:$0xf] %vm146, %v142
    %148 = vst.msk [vmem:[#allocation7 + $0x4] sm:$0xf] %vm146, %v143
    // Predicated region
    $region22: #{tpu_custom_call.1} parent=1 // pred_check
      _
    $region23: #{tpu_custom_call.1} parent=1 // pred_check_branch
      %150 = sbr.rel (0) target = $region25
    $region24: #{tpu_custom_call.1} parent=1 // pred_region
      %s152 = ssub.s32 128, 128
      %153 = vsyncadd [#allocation4], %s152
      %s154 = sshll.u32 [#allocation7], 4
      %s155 = int_to_ptr.vmem [resolvable:$true] %s154
      %160 = dma.vmem_to_hbm [thread:$0]  %s155, 128, %s3, [#allocation4], 64, 64, 4
    $region25: #{tpu_custom_call.1} parent=1 // pred_fallthru
      _
    // Predicated region
    $region26: #{tpu_custom_call.1} parent=1 // pred_check
      _
    $region27: #{tpu_custom_call.1} parent=1 // pred_check_branch
      %162 = sbr.rel (0) target = $region29
    $region28: #{tpu_custom_call.1} parent=1 // pred_region
      %163 = dma.done [#allocation4], 128
    $region29: #{tpu_custom_call.1} parent=1 // pred_fallthru
      _
    %164 = vsyncpa [#allocation3], 1
    %165 = vsyncpa [#allocation6], 1
    %166 = vsyncpa [#allocation4], 1

</llo_original>
